<compile_context>
chip_gen: v7x
topology: tpu7x:2x2x1
jax: 0.10.0
libtpu: 0.0.40
codegen_flags: <defaults>
</compile_context>

<pallas_src>
import functools

import jax
import jax.numpy as jnp
from jax.experimental import pallas as pl
from jax.experimental.pallas import tpu as pltpu


def _choose_tiles(N, C, HW, *, f32_block_budget=2 << 20, min_grid_steps=2):
    """Pick (nb, lane_tile, padded_HW).

    lane_tile is a multiple of 128 whose (1, C, lane_tile) f32 block stays within the
    byte budget (C-aware) while minimizing the lane-padding waste; nb blocks several
    batch rows per grid step when HW is small, as long as enough grid steps remain
    for pipelining / megacore sharding.
    """
    hw_ceil128 = -(-HW // 128) * 128
    max_k = max(1, f32_block_budget // (4 * C * 128))
    max_k = min(max_k, hw_ceil128 // 128)

    best_k, best_waste = 1, None
    for cand in range(1, max_k + 1):
        tl = 128 * cand
        waste = -(-HW // tl) * tl - HW
        if best_waste is None or waste <= best_waste:   # prefer larger tile on ties
            best_k, best_waste = cand, waste
    tl = 128 * best_k
    hw_pad = -(-HW // tl) * tl
    n_lane_blocks = hw_pad // tl

    nb = 1
    for cand in range(2, N + 1):
        if N % cand:
            continue
        if cand * C * tl * 4 > f32_block_budget:
            break
        if (N // cand) * n_lane_blocks < min_grid_steps:
            break
        nb = cand
    return nb, tl, hw_pad


def _lrn_kernel(scale_ref, x_ref, o_ref, pad_ref, *, half, beta, k, num_channels):
    # x_ref / o_ref: (nb, C, tl) tile.  scale_ref: (1, C, 1) = alpha / valid_count(c).
    # pad_ref: (nb, C + 2*half, tl) f32 scratch used as a zero-padded channel buffer.
    C = num_channels
    xf = x_ref[...].astype(jnp.float32)      # single up-cast
    sq = xf * xf
    nb, _, tl = xf.shape

    if half > 0:
        # Pad rows are re-zeroed every step (only 2*half tiny rows), so correctness
        # does not depend on grid-iteration order / which core ran step 0.
        pad_ref[:, :half, :] = jnp.zeros((nb, half, tl), jnp.float32)
        pad_ref[:, half + C:, :] = jnp.zeros((nb, half, tl), jnp.float32)
        pad_ref[:, half:half + C, :] = sq

        win = sq                              # center tap, reused from vregs
        for w in range(2 * half + 1):         # shifted reads from the padded buffer
            if w == half:
                continue
            win = win + pad_ref[:, w:w + C, :]
    else:
        win = sq

    # denom = k + alpha * (window_sum / valid_count); alpha and the
    # count_include_pad=False divisor are baked into the precomputed scale vector.
    denom = jnp.float32(k) + win * scale_ref[...]

    # out = x * denom**(-beta), avoiding pow followed by a divide.
    if beta == 0.75:
        t = jax.lax.rsqrt(denom)
        inv_denom = t * jnp.sqrt(t)           # d^(-1/2) * d^(-1/4) = d^(-3/4)
    elif beta == 0.5:
        inv_denom = jax.lax.rsqrt(denom)
    elif beta == 1.0:
        inv_denom = 1.0 / denom
    else:
        inv_denom = jnp.exp(jnp.float32(-beta) * jnp.log(denom))

    o_ref[...] = (xf * inv_denom).astype(o_ref.dtype)   # single down-cast


def local_response_normalization(x, *, n=5, alpha=1e-4, beta=0.75, k=2.0):
    """x: (N, C, H, W) float array. Returns array of same shape/dtype."""
    assert k > 0, "k must be > 0 so the normalization denominator is strictly positive"
    N, C, H, W = x.shape
    HW = H * W
    half = n // 2

    nb, tl, hw_pad = _choose_tiles(N, C, HW)

    xr = x.reshape(N, C, HW)
    if hw_pad != HW:
        # Zero-pad the flattened spatial axis so every lane block is a dense
        # multiple of 128; padded lanes produce zeros and are sliced off below.
        xr = jnp.pad(xr, ((0, 0), (0, 0), (0, hw_pad - HW)))

    # alpha / (#valid channels in the window) per output channel
    # (count_include_pad=False semantics), hoisted out of the kernel entirely.
    c_idx = jnp.arange(C, dtype=jnp.float32)
    lo = jnp.maximum(c_idx - half, 0.0)
    hi = jnp.minimum(c_idx + half, float(C - 1))
    scale = (jnp.float32(alpha) / (hi - lo + 1.0)).reshape(1, C, 1)

    kernel = functools.partial(_lrn_kernel, half=half, beta=beta, k=k,
                               num_channels=C)

    # VMEM budget derived from the actual tile (double-buffered in/out, the padded
    # channel scratch, generous headroom for live f32 temps) instead of a fixed cap.
    blk_in = nb * C * tl * x.dtype.itemsize
    blk_f32 = nb * C * tl * 4
    scratch_bytes = nb * (C + 2 * half) * tl * 4
    need = 4 * blk_in + scratch_bytes + 6 * blk_f32 + C * 128 * 4 + (2 << 20)
    vmem_limit = int(min(48 * 1024 * 1024, max(24 * 1024 * 1024, need)))

    grid = (N // nb, hw_pad // tl)

    out = pl.pallas_call(
        kernel,
        out_shape=jax.ShapeDtypeStruct((N, C, hw_pad), x.dtype),
        grid_spec=pltpu.PrefetchScalarGridSpec(
            num_scalar_prefetch=0,
            grid=grid,
            in_specs=[
                pl.BlockSpec((1, C, 1), lambda b, l: (0, 0, 0)),     # scale vector
                pl.BlockSpec((nb, C, tl), lambda b, l: (b, 0, l)),   # input tile
            ],
            out_specs=pl.BlockSpec((nb, C, tl), lambda b, l: (b, 0, l)),
            scratch_shapes=[pltpu.VMEM((nb, C + 2 * half, tl), jnp.float32)],
        ),
        compiler_params=pltpu.CompilerParams(
            dimension_semantics=("parallel", "parallel"),
            vmem_limit_bytes=vmem_limit,
        ),
    )(scale, xr)

    if hw_pad != HW:
        out = out[:, :, :HW]
    return out.reshape(N, C, H, W)


def _lrn_reference(x, *, n=5, alpha=1e-4, beta=0.75, k=2.0):
    """Pure-JAX reference matching torch avg_pool3d(count_include_pad=False)."""
    N, C, H, W = x.shape
    sq = (x * x).astype(jnp.float32)
    half = n // 2
    rows = []
    for c in range(C):
        lo = max(0, c - half)
        hi = min(C, c + half + 1)
        rows.append(sq[:, lo:hi].sum(axis=1) / float(hi - lo))
    divisor = jnp.stack(rows, axis=1)
    denom = (k + alpha * divisor) ** beta
    return (x.astype(jnp.float32) / denom).astype(x.dtype)


if __name__ == "__main__":
    key = jax.random.PRNGKey(0)
    x = jax.random.normal(key, (2, 4, 16, 16), dtype=jnp.float32)

    out = local_response_normalization(x, n=5, alpha=1e-4, beta=0.75, k=2.0)
    out = jax.block_until_ready(out)

    ref = _lrn_reference(x, n=5, alpha=1e-4, beta=0.75, k=2.0)
    assert out.shape == x.shape and out.dtype == x.dtype
    assert jnp.allclose(out, ref, atol=1e-5, rtol=1e-5), "mismatch vs reference"

    print("KERNEL_OK")
</pallas_src>

<mosaic_0001>
module attributes {stable_mosaic.version = 11 : i64} {
  func.func @_lrn_kernel(%arg0: i32, %arg1: i32, %arg2: memref<1x4x1xf32, #tpu.memory_space<vmem>>, %arg3: memref<1x4x256xf32, #tpu.memory_space<vmem>>, %arg4: memref<1x4x256xf32, #tpu.memory_space<vmem>>, %arg5: memref<1x8x256xf32, #tpu.memory_space<vmem>>) attributes {dimension_semantics = [#tpu.dimension_semantics<parallel>, #tpu.dimension_semantics<parallel>], iteration_bounds = array<i64: 2, 1>, scalar_prefetch = 0 : i64, scratch_operands = 1 : i64, tpu.core_type = #tpu.core_type<tc>, window_params = [{pipeline_mode = #tpu.pipeline_mode<synchronous>, transform_indices = @transform_0, window_bounds = array<i64: 1, 4, 1>}, {transform_indices = @transform_1, window_bounds = array<i64: 1, 4, 256>}, {transform_indices = @transform_2, window_bounds = array<i64: 1, 4, 256>}]} {
    %c0 = arith.constant 0 : index
    %c0_0 = arith.constant 0 : index
    %c0_1 = arith.constant 0 : index
    %0 = vector.load %arg3[%c0, %c0_0, %c0_1] : memref<1x4x256xf32, #tpu.memory_space<vmem>>, vector<1x4x256xf32>
    %1 = arith.mulf %0, %0 : vector<1x4x256xf32>
    %cst = arith.constant 0.000000e+00 : f32
    %2 = vector.broadcast %cst : f32 to vector<1x2x256xf32>
    %c0_2 = arith.constant 0 : index
    %c0_3 = arith.constant 0 : index
    %c0_4 = arith.constant 0 : index
    %3 = vector.load %arg5[%c0_2, %c0_3, %c0_4] : memref<1x8x256xf32, #tpu.memory_space<vmem>>, vector<1x2x256xf32>
    tpu.vector_store %arg5[%c0_2, %c0_3, %c0_4], %2 {strides = array<i32>} : memref<1x8x256xf32, #tpu.memory_space<vmem>>, vector<1x2x256xf32>,
    %cst_5 = arith.constant 0.000000e+00 : f32
    %4 = vector.broadcast %cst_5 : f32 to vector<1x2x256xf32>
    %c0_6 = arith.constant 0 : index
    %c6 = arith.constant 6 : index
    %c0_7 = arith.constant 0 : index
    %5 = vector.load %arg5[%c0_6, %c6, %c0_7] : memref<1x8x256xf32, #tpu.memory_space<vmem>>, vector<1x2x256xf32>
    tpu.vector_store %arg5[%c0_6, %c6, %c0_7], %4 {strides = array<i32>} : memref<1x8x256xf32, #tpu.memory_space<vmem>>, vector<1x2x256xf32>,
    %c0_8 = arith.constant 0 : index
    %c2 = arith.constant 2 : index
    %c0_9 = arith.constant 0 : index
    %6 = vector.load %arg5[%c0_8, %c2, %c0_9] : memref<1x8x256xf32, #tpu.memory_space<vmem>>, vector<1x4x256xf32>
    tpu.vector_store %arg5[%c0_8, %c2, %c0_9], %1 {strides = array<i32>} : memref<1x8x256xf32, #tpu.memory_space<vmem>>, vector<1x4x256xf32>,
    %c0_10 = arith.constant 0 : index
    %c0_11 = arith.constant 0 : index
    %c0_12 = arith.constant 0 : index
    %7 = vector.load %arg5[%c0_10, %c0_11, %c0_12] : memref<1x8x256xf32, #tpu.memory_space<vmem>>, vector<1x4x256xf32>
    %8 = arith.addf %1, %7 : vector<1x4x256xf32>
    %c0_13 = arith.constant 0 : index
    %c1 = arith.constant 1 : index
    %c0_14 = arith.constant 0 : index
    %9 = vector.load %arg5[%c0_13, %c1, %c0_14] : memref<1x8x256xf32, #tpu.memory_space<vmem>>, vector<1x4x256xf32>
    %10 = arith.addf %8, %9 : vector<1x4x256xf32>
    %c0_15 = arith.constant 0 : index
    %c3 = arith.constant 3 : index
    %c0_16 = arith.constant 0 : index
    %11 = vector.load %arg5[%c0_15, %c3, %c0_16] : memref<1x8x256xf32, #tpu.memory_space<vmem>>, vector<1x4x256xf32>
    %12 = arith.addf %10, %11 : vector<1x4x256xf32>
    %c0_17 = arith.constant 0 : index
    %c4 = arith.constant 4 : index
    %c0_18 = arith.constant 0 : index
    %13 = vector.load %arg5[%c0_17, %c4, %c0_18] : memref<1x8x256xf32, #tpu.memory_space<vmem>>, vector<1x4x256xf32>
    %14 = arith.addf %12, %13 : vector<1x4x256xf32>
    %c0_19 = arith.constant 0 : index
    %c0_20 = arith.constant 0 : index
    %c0_21 = arith.constant 0 : index
    %15 = vector.load %arg2[%c0_19, %c0_20, %c0_21] : memref<1x4x1xf32, #tpu.memory_space<vmem>>, vector<1x4x1xf32>
    %16 = vector.broadcast %15 : vector<1x4x1xf32> to vector<1x4x256xf32>
    %17 = arith.mulf %14, %16 : vector<1x4x256xf32>
    %cst_22 = arith.constant 2.000000e+00 : f32
    %18 = vector.broadcast %cst_22 : f32 to vector<1x4x256xf32>
    %19 = arith.addf %18, %17 : vector<1x4x256xf32>
    %20 = math.rsqrt %19 : vector<1x4x256xf32>
    %21 = math.sqrt %20 : vector<1x4x256xf32>
    %22 = arith.mulf %20, %21 : vector<1x4x256xf32>
    %23 = arith.mulf %0, %22 : vector<1x4x256xf32>
    %c0_23 = arith.constant 0 : index
    %c0_24 = arith.constant 0 : index
    %c0_25 = arith.constant 0 : index
    %24 = vector.load %arg4[%c0_23, %c0_24, %c0_25] : memref<1x4x256xf32, #tpu.memory_space<vmem>>, vector<1x4x256xf32>
    tpu.vector_store %arg4[%c0_23, %c0_24, %c0_25], %23 {strides = array<i32>} : memref<1x4x256xf32, #tpu.memory_space<vmem>>, vector<1x4x256xf32>,
    return
  }
  func.func @transform_0(%arg0: i32, %arg1: i32) -> (i32, i32, i32) {
    %c0_i32 = arith.constant 0 : i32
    %c0_i32_0 = arith.constant 0 : i32
    %c0_i32_1 = arith.constant 0 : i32
    %c0_i32_2 = arith.constant 0 : i32
    return %c0_i32, %c0_i32_0, %c0_i32_1 : i32, i32, i32
  }
  func.func @transform_1(%arg0: i32, %arg1: i32) -> (i32, i32, i32) {
    %c0_i32 = arith.constant 0 : i32
    %c0_i32_0 = arith.constant 0 : i32
    return %arg0, %c0_i32, %arg1 : i32, i32, i32
  }
  func.func @transform_2(%arg0: i32, %arg1: i32) -> (i32, i32, i32) {
    %c0_i32 = arith.constant 0 : i32
    %c0_i32_0 = arith.constant 0 : i32
    return %arg0, %c0_i32, %arg1 : i32, i32, i32
  }
}

</mosaic_0001>

<llo_original>
// kernel: tpu_custom_call.1
$region0: #{tpu_custom_call.1}
  #allocation0 [shape = 'u32[]', space=smem, size = 0x4, offset = 0x4, fixed_abs, tag = 'smem constant byte address 0x4 - core index']
  #allocation1 [shape = 'u32[144,128]{1,0:T(1,128)}', space=vmem, size = 0x12000, scoped, tag = 'internal scratch']
  #allocation2 [shape = 'f32[1,8,256]{2,1,0:T(8,128)}', space=vmem, size = 0x2000, scoped, tag = 'scratch operand']
  %s0 = inlined_call_operand.vmem [shape: f32[1,4,1], index: 0, kind: input, shape index: {}]
  %s1 = inlined_call_operand.hbm [shape: f32[2,4,256], index: 1, kind: input, shape index: {}]
  %s2 = inlined_call_operand.hbm [shape: f32[2,4,256], index: 2, kind: output, shape index: {}]
  %s3 = sld [smem:[#allocation0]]
  $region45: #{tpu_custom_call.1} parent=0
    _
  %s5 = ssub.s32 1, %s3
  %s6 = scalar_select 0, %s5, %s3
  $region1: #{tpu_custom_call.1} parent=0
    #allocation3 [shape = 'u8[8192]{0}', space=vmem, size = 0x2000, scoped, tag = 'input window, operand 1']
    #allocation4 [shape = 's32[2]{0}', space=sflag, size = 0x8, scoped, tag = 'scoped memory for tpu_custom_call.1']
    #allocation5 [shape = 's32[2]{0}', space=sflag, size = 0x8, scoped, tag = 'scoped memory for tpu_custom_call.1']
    #allocation6 [shape = 'u8[8192]{0}', space=vmem, size = 0x2000, scoped, tag = 'output window, operand 0']
    %7 = vsyncpa [#allocation4], 0
    %s8 = scalar_lea.sflag [#allocation4], 1
    %9 = vsyncpa %s8, 0
    %10 = vsyncpa [#allocation5], 0
    %s11 = scalar_lea.sflag [#allocation5], 1
    %12 = vsyncpa %s11, 0
    loop: start=0, step=1, limit=4
    $region2: #{tpu_custom_call.1} parent=1 // loop_pre_header
      _
    $region3: #{tpu_custom_call.1} parent=1 // loop_header
      %s14 = sphi 0, %s18
      %p15 = scmp.ge.s32.totalorder %s14, 4
      %s21 = sphi 0, %s33
      %s22 = sphi 0, %s29
      %s23 = sphi 0, %s21
      %s24 = sphi 0, %s22
      %s25 = sphi 0, %s23
      %s26 = sphi 0, %s24
      %s34 = sphi 0, %s34
      %s36 = sphi 0, %s34
      %s37 = sphi 0, %s36
      %s51 = sphi 0, %s37
      %s59 = sphi 0, %s61
      %s62 = sphi 0, %s59
      %s63 = sphi 0, %s62
      %s79 = sphi 0, %s63
      %s87 = sphi 0, %s89
      %s90 = sphi 0, %s87
      %s91 = sphi 0, %s90
      %s107 = sphi 0, %s91
    $region4: #{tpu_custom_call.1} parent=1 // loop_header_branch
      %17 = sbr.rel (%p15) target = $region8
    $region5: #{tpu_custom_call.1} parent=1 // loop_body
      %s19 = ssub.s32 %s14, 1
      %s20 = ssub.s32 %s14, 2
      %s27 = sadd.s32 1, %s22
      %p28 = scmp.ge.s32.totalorder %s27, 1
      %s29 = scalar_select %p28, 0, %s27
      %s30 = sadd.s32 1, %s21
      %s31 = scalar_select %p28, %s30, %s21
      %p32 = scmp.ge.s32.totalorder %s31, 2
      %s33 = scalar_select %p32, 0, %s31
      %s35 = sadd.s32 %s34, 1
      %p38 = scmp.eq.s32.totalorder %s14, 1
      %p39 = scmp.ne.s32.totalorder %s34, %s36
      %p40 = scmp.eq.s32.totalorder %s14, 0
      %p41 = por %p39, %p40
      %p42 = scmp.ne.s32.totalorder %s34, %s36
      %p43 = scmp.eq.s32.totalorder %s19, 1
      %p44 = por %p42, %p43
      %p45 = scmp.ne.s32.totalorder %s36, %s37
      %p46 = scmp.eq.s32.totalorder %s19, 0
      %p47 = por %p45, %p46
      %p48 = scmp.ne.s32.totalorder %s36, %s37
      %p49 = scmp.eq.s32.totalorder %s20, 1
      %p50 = por %p48, %p49
      %p52 = scmp.ne.s32.totalorder %s37, %s51
      %p53 = scmp.eq.s32.totalorder %s20, 0
      %p54 = por %p52, %p53
      %s55 = ssub.s32 %s21, %s33
      %s56 = ssub.s32 %s22, %s29
      %s57 = sor.u32 %s55, %s56
      %p58 = scmp.eq.s32.totalorder %s57, 0
      %s60 = sadd.s32 %s59, 1
      %s61 = scalar_select %p58, %s59, %s60
      %p64 = pneg %p58
      %p65 = scmp.eq.s32.totalorder %s14, 1
      %p66 = por %p64, %p65
      %p67 = scmp.ne.s32.totalorder %s59, %s62
      %p68 = scmp.eq.s32.totalorder %s14, 0
      %p69 = por %p67, %p68
      %p70 = scmp.ne.s32.totalorder %s59, %s62
      %p71 = scmp.eq.s32.totalorder %s19, 1
      %p72 = por %p70, %p71
      %p73 = scmp.ne.s32.totalorder %s62, %s63
      %p74 = scmp.eq.s32.totalorder %s19, 0
      %p75 = por %p73, %p74
      %p76 = scmp.ne.s32.totalorder %s62, %s63
      %p77 = scmp.eq.s32.totalorder %s20, 1
      %p78 = por %p76, %p77
      %p80 = scmp.ne.s32.totalorder %s63, %s79
      %p81 = scmp.eq.s32.totalorder %s20, 0
      %p82 = por %p80, %p81
      %s83 = ssub.s32 %s21, %s33
      %s84 = ssub.s32 %s22, %s29
      %s85 = sor.u32 %s83, %s84
      %p86 = scmp.eq.s32.totalorder %s85, 0
      %s88 = sadd.s32 %s87, 1
      %s89 = scalar_select %p86, %s87, %s88
      %p92 = pneg %p86
      %p93 = scmp.eq.s32.totalorder %s14, 1
      %p94 = por %p92, %p93
      %p95 = scmp.ne.s32.totalorder %s87, %s90
      %p96 = scmp.eq.s32.totalorder %s14, 0
      %p97 = por %p95, %p96
      %p98 = scmp.ne.s32.totalorder %s87, %s90
      %p99 = scmp.eq.s32.totalorder %s19, 1
      %p100 = por %p98, %p99
      %p101 = scmp.ne.s32.totalorder %s90, %s91
      %p102 = scmp.eq.s32.totalorder %s19, 0
      %p103 = por %p101, %p102
      %p104 = scmp.ne.s32.totalorder %s90, %s91
      %p105 = scmp.eq.s32.totalorder %s20, 1
      %p106 = por %p104, %p105
      %p108 = scmp.ne.s32.totalorder %s91, %s107
      %p109 = scmp.eq.s32.totalorder %s20, 0
      %p110 = por %p108, %p109
      %p111 = scmp.le.s32.totalorder 1, %s14
      %p112 = scmp.lt.s32.totalorder %s14, 3
      %p113 = pnand %p111, %p112
      %p114 = pneg %p113
      // Predicated region
      $region9: #{tpu_custom_call.1} parent=5 // pred_check
        _
      $region10: #{tpu_custom_call.1} parent=5 // pred_check_branch
        %116 = sbr.rel (%p113) target = $region12
      $region11: #{tpu_custom_call.1} parent=5 // pred_region
        %s117 = ssub.s32 %s14, 1
        // Predicated region
        $region13: #{tpu_custom_call.1} parent=11 // pred_check
          %p118 = pneg %p47
        $region14: #{tpu_custom_call.1} parent=11 // pred_check_branch
          %120 = sbr.rel (%p118) target = $region16
        $region15: #{tpu_custom_call.1} parent=11 // pred_region
          _
        $region16: #{tpu_custom_call.1} parent=11 // pred_fallthru
          _
      $region12: #{tpu_custom_call.1} parent=5 // pred_fallthru
        _
      %p121 = scmp.lt.s32.totalorder %s14, 2
      // Predicated region
      $region17: #{tpu_custom_call.1} parent=5 // pred_check
        %p122 = pneg %p121
      $region18: #{tpu_custom_call.1} parent=5 // pred_check_branch
        %124 = sbr.rel (%p122) target = $region20
      $region19: #{tpu_custom_call.1} parent=5 // pred_region
        // Predicated region
        $region21: #{tpu_custom_call.1} parent=19 // pred_check
          %p125 = pneg %p69
        $region22: #{tpu_custom_call.1} parent=19 // pred_check_branch
          %127 = sbr.rel (%p125) target = $region24
        $region23: #{tpu_custom_call.1} parent=19 // pred_region
          %s128 = sand.u32 %s59, 1
          %s129 = scalar_lea.sflag [#allocation4], %s128
          %s130 = sand.u32 %s59, 1
          %s131 = smul.addr %s130, 8
          %s132 = scalar_lea.vmem [#allocation3], %s131
          %s133 = smul.u32 2, %s22
          %s135 = ssub.s32 128, 128
          %136 = vsyncadd %s129, %s135
          %s137 = smul.addr %s21, 2
          %s138 = sadd.s32 %s133, %s137
          %s139 = smul.addr %s138, 64
          %s140 = scalar_lea.hbm %s1, %s139
          %s142 = sshll.u32 %s132, 4
          %s143 = int_to_ptr.vmem [resolvable:$true] %s142
          %145 = dma.hbm_to_vmem [thread:$0]  %s140, 128, %s143, %s129
        $region24: #{tpu_custom_call.1} parent=19 // pred_fallthru
          _
      $region20: #{tpu_custom_call.1} parent=5 // pred_fallthru
        _
      %p146 = scmp.le.s32.totalorder 1, %s14
      %p147 = scmp.lt.s32.totalorder %s14, 3
      %p148 = pnand %p146, %p147
      %p149 = pneg %p148
      // Predicated region
      $region25: #{tpu_custom_call.1} parent=5 // pred_check
        _
      $region26: #{tpu_custom_call.1} parent=5 // pred_check_branch
        %151 = sbr.rel (%p148) target = $region28
      $region27: #{tpu_custom_call.1} parent=5 // pred_region
        %s152 = ssub.s32 %s14, 1
        %s153 = sand.u32 %s62, 1
        %s154 = scalar_lea.sflag [#allocation4], %s153
        %s155 = sand.u32 %s62, 1
        %s156 = smul.addr %s155, 8
        %s157 = scalar_lea.vmem [#allocation3], %s156
        // Predicated region
        $region29: #{tpu_custom_call.1} parent=27 // pred_check
          %p158 = pneg %p75
        $region30: #{tpu_custom_call.1} parent=27 // pred_check_branch
          %160 = sbr.rel (%p158) target = $region32
        $region31: #{tpu_custom_call.1} parent=27 // pred_region
          %161 = dma.done %s154, 128
        $region32: #{tpu_custom_call.1} parent=27 // pred_fallthru
          _
        %p162 = pneg %p47
        %p163 = pneg %p44
        %s164 = sand.u32 %s62, 1
        %s165 = scalar_lea.sflag [#allocation4], %s164
        %s166 = sand.u32 %s62, 1
        %s167 = smul.addr %s166, 8
        %s168 = scalar_lea.vmem [#allocation3], %s167
        %p169 = pneg %p75
        %p170 = pneg %p72
        %p171 = pneg %p103
        %p172 = pneg %p100
        %s173 = sand.u32 %s90, 1
        %s174 = scalar_lea.sflag [#allocation5], %s173
        %s175 = sand.u32 %s90, 1
        %s176 = smul.addr %s175, 8
        %s177 = scalar_lea.vmem [#allocation6], %s176
        %s178 = smul.u32 2, %s24
        %s179 = smul.u32 2, %s24
        %v180 = vld [vmem:[%s157] sm:$0xff]
        %v181 = vmul.f32 %v180, %v180
        %182 = vst [vmem:[#allocation2] sm:$0x3] 0.0
        %183 = vst [vmem:[#allocation2 + $0x8] sm:$0x3] 0.0
        %184 = vst [vmem:[#allocation2] sm:$0xc0] 0.0
        %185 = vst [vmem:[#allocation2 + $0x8] sm:$0xc0] 0.0
        %v187 = vcombine.high %v181, %v181
        %v188 = vrot.slane %v181, 6
        %v189 = vrot.slane %v187, 6
        %192 = vst [vmem:[#allocation2] sm:$0x3c] %v188
        %193 = vst [vmem:[#allocation2 + $0x8] sm:$0x3c] %v189
        %v194 = vld [vmem:[#allocation2] sm:$0xf]
        %v195 = vld [vmem:[#allocation2 + $0x8] sm:$0xf]
        %v198 = vcombine.low %v194, %v195
        %v200 = vadd.f32 %v181, %v198
        %v201 = vld [vmem:[#allocation2] sm:$0x1e]
        %v202 = vld [vmem:[#allocation2 + $0x8] sm:$0x1e]
        %v205 = vcombine.low %v201, %v202
        %v206 = vcombine.high %v201, %v202
        %vm207 = vcmask 1042432
        %vm208 = vcmask 1046532
        %vm209 = vmor %vm207, %vm208
        %v210 = vrot.slane %v205, 5
        %v211 = vrot.slane %v210, 4
        %v212 = vrot.slane %v206, 5
        %v213 = vsel %vm209, %v211, %v212
        %v215 = vadd.f32 %v200, %v213
        %v216 = vld [vmem:[#allocation2] sm:$0x78]
        %v217 = vld [vmem:[#allocation2 + $0x8] sm:$0x78]
        %v220 = vcombine.low %v216, %v217
        %v221 = vcombine.high %v216, %v217
        %vm222 = vcmask 1040384
        %vm223 = vcmask 1044484
        %vm224 = vmor %vm222, %vm223
        %v225 = vrot.slane %v220, 7
        %v226 = vrot.slane %v225, 4
        %v227 = vrot.slane %v221, 7
        %v228 = vsel %vm224, %v226, %v227
        %v230 = vadd.f32 %v215, %v228
        %v231 = vld [vmem:[#allocation2] sm:$0xf0]
        %v232 = vld [vmem:[#allocation2 + $0x8] sm:$0xf0]
        %v235 = vcombine.high %v231, %v232
        %v237 = vadd.f32 %v230, %v235
        %v238 = vld [vmem:[%s0] sm:$0xf]
        %240 = vset.pattern.permute.xlu0 0
        %241 = vperm.xlu0 %240, %v238
        %v242 = vpop.permute.xlu0 %241
        %v244 = vunpack.c.l.s4 839922192
        %v245 = vunpack.c.0.s8 %v244
        %v246 = vlaneseq
        %v247 = vshrl.u32 %v246, 7
        %v248 = vsub.s32 %v245, %v247
        %v249 = vrot.slane %v242, %v248
        %v251 = vmul.f32 %v237, %v249
        %v252 = vadd.f32 %v251, 2.0
        %v253 = vrsqrt.pop %v252
        %v254 = vrsqrt.pop %v253
        %v255 = vmul.f32 %v253, %v254
        %vm256 = vcmp.eq.f32.partialorder %v253, inf
        %v257 = vsel %vm256, %v253, %v255
        %vm258 = vcmp.eq.f32.partialorder %v253, 0.0
        %v259 = vand.u32 %v253, 2147483648
        %v260 = vsel %vm258, %v259, %v257
        %v261 = vmul.f32 %v253, %v260
        %v262 = vmul.f32 %v180, %v261
        %263 = vst [vmem:[%s177] sm:$0xff] %v262
        %s264 = sand.u32 %s90, 1
        %s265 = scalar_lea.sflag [#allocation5], %s264
        %s266 = sand.u32 %s90, 1
        %s267 = smul.addr %s266, 8
        %s268 = scalar_lea.vmem [#allocation6], %s267
        // Predicated region
        $region33: #{tpu_custom_call.1} parent=27 // pred_check
          %p269 = pneg %p100
        $region34: #{tpu_custom_call.1} parent=27 // pred_check_branch
          %271 = sbr.rel (%p269) target = $region36
        $region35: #{tpu_custom_call.1} parent=27 // pred_region
          %s272 = smul.u32 2, %s24
          %s274 = ssub.s32 128, 128
          %275 = vsyncadd %s265, %s274
          %s276 = smul.addr %s23, 2
          %s277 = sadd.s32 %s272, %s276
          %s278 = smul.addr %s277, 64
          %s279 = scalar_lea.hbm %s2, %s278
          %s281 = sshll.u32 %s268, 4
          %s282 = int_to_ptr.vmem [resolvable:$true] %s281
          %284 = dma.vmem_to_hbm [thread:$0]  %s282, 128, %s279, %s265
        $region36: #{tpu_custom_call.1} parent=27 // pred_fallthru
          _
      $region28: #{tpu_custom_call.1} parent=5 // pred_fallthru
        _
      %p285 = scmp.le.s32.totalorder 2, %s14
      // Predicated region
      $region37: #{tpu_custom_call.1} parent=5 // pred_check
        %p286 = pneg %p285
      $region38: #{tpu_custom_call.1} parent=5 // pred_check_branch
        %288 = sbr.rel (%p286) target = $region40
      $region39: #{tpu_custom_call.1} parent=5 // pred_region
        %s289 = ssub.s32 %s14, 2
        // Predicated region
        $region41: #{tpu_custom_call.1} parent=39 // pred_check
          %p290 = pneg %p106
        $region42: #{tpu_custom_call.1} parent=39 // pred_check_branch
          %292 = sbr.rel (%p290) target = $region44
        $region43: #{tpu_custom_call.1} parent=39 // pred_region
          %s293 = sand.u32 %s91, 1
          %s294 = scalar_lea.sflag [#allocation5], %s293
          %s295 = sand.u32 %s91, 1
          %s296 = smul.addr %s295, 8
          %s297 = scalar_lea.vmem [#allocation6], %s296
          %298 = dma.done %s294, 128
        $region44: #{tpu_custom_call.1} parent=39 // pred_fallthru
          _
      $region40: #{tpu_custom_call.1} parent=5 // pred_fallthru
        _
    $region6: #{tpu_custom_call.1} parent=1 // loop_footer
      %s18 = sadd.s32 1, %s14
    $region7: #{tpu_custom_call.1} parent=1 // loop_footer_branch
      %13 = sbr.rel target = $region3
    $region8: #{tpu_custom_call.1} parent=1 // loop_exit
      _
    %299 = vsyncpa [#allocation4], 1
    %s300 = scalar_lea.sflag [#allocation4], 1
    %301 = vsyncpa %s300, 1
    %302 = vsyncpa [#allocation5], 1
    %s303 = scalar_lea.sflag [#allocation5], 1
    %304 = vsyncpa %s303, 1

</llo_original>
